<compile_context>
chip_gen: v7x
topology: tpu7x:2x2x1
jax: 0.10.0
libtpu: 0.0.40
codegen_flags: <defaults>
</compile_context>

<pallas_src>
import functools

import jax
import jax.numpy as jnp
from jax.experimental import pallas as pl
from jax.experimental.pallas import tpu as pltpu


def coordconv3d_kernel(p_ref, w_ref, cb_ref, o_ref):
    """One batch element per grid step.

    p_ref  : (1, P, M)    bf16 im2col patches, P = K^3*Cin, M = Do^3
    w_ref  : (Cout, P)    bf16 flattened conv weights (real input channels),
                          column index = ((kz*K + ky)*K + kx)*Cin + c
    cb_ref : (Cout, M)    f32 precomputed coord-channel contribution + bias
    o_ref  : (1, Cout, M) f32 output slab (lane-dense last dim)
    """
    acc = jnp.dot(w_ref[...], p_ref[0], preferred_element_type=jnp.float32)
    o_ref[0] = (acc + cb_ref[...]).astype(o_ref.dtype)


def coordconv3d(x_ncdhw, w_oidhw, bias, *, kernel_size):
    """CoordConv3d forward.  x: (B, Cin, D, D, D) NCDHW -> (B, Cout, Do, Do, Do)."""
    B, Cin, D, Dy, Dx = x_ncdhw.shape
    assert D == Dy == Dx, "reference rank-3 AddCoords requires a cubic volume"
    K = kernel_size
    Cout = w_oidhw.shape[0]
    Do = D - K + 1
    M = Do * Do * Do
    P = K * K * K * Cin

    x = x_ncdhw.astype(jnp.float32)

    # --- im2col patch slab (B, P, M), tap-major then channel, built once. ---
    # patches[b, t*Cin + c, (z*Do + y)*Do + x] = x[b, c, kz+z, ky+y, kx+x]
    taps = []
    for kz in range(K):
        for ky in range(K):
            for kx in range(K):
                taps.append(
                    x[:, :, kz:kz + Do, ky:ky + Do, kx:kx + Do].reshape(B, Cin, M))
    patches = jnp.stack(taps, axis=1).reshape(B, P, M).astype(jnp.bfloat16)

    # --- flattened weights for the real input channels (same tap-major order) ---
    w_in = jnp.transpose(w_oidhw[:, :Cin].astype(jnp.float32), (0, 2, 3, 4, 1))
    w2d = w_in.reshape(Cout, P).astype(jnp.bfloat16)

    # --- batch-independent coord-channel contribution + bias (computed once, f32;
    #     reproduces the reference AddCoords rank-3 formulas, including the
    #     zz = (yy/(dim_z-1))/(dim_x-1) quirk). ---
    zi = jnp.arange(D, dtype=jnp.float32)[:, None, None]   # spatial axis 0
    yi = jnp.arange(D, dtype=jnp.float32)[None, :, None]   # spatial axis 1
    xx = jnp.broadcast_to(zi, (D, D, D)) / (D - 1) * 2.0 - 1.0
    yyn = jnp.broadcast_to(yi, (D, D, D)) / (D - 1)
    yy = yyn * 2.0 - 1.0
    zz = yyn / (D - 1) * 2.0 - 1.0
    coords = jnp.stack([xx, yy, zz], axis=0)[None]          # (1, 3, D, D, D)
    w_cd = w_oidhw[:, Cin:].astype(jnp.float32)             # (Cout, 3, K, K, K)
    cb = jax.lax.conv_general_dilated(
        coords, w_cd, window_strides=(1, 1, 1), padding="VALID",
        dimension_numbers=("NCDHW", "OIDHW", "NCDHW"),
        precision=jax.lax.Precision.HIGHEST)
    cb = cb[0] + bias.astype(jnp.float32)[:, None, None, None]
    cb = cb.reshape(Cout, M)                                 # (Cout, Do^3) f32

    cost = pl.CostEstimate(
        flops=2 * B * Cout * P * M,
        transcendentals=0,
        bytes_accessed=(patches.size * 2 + w2d.size * 2 + cb.size * 4
                        + B * Cout * M * 4))

    out = pl.pallas_call(
        coordconv3d_kernel,
        out_shape=jax.ShapeDtypeStruct((B, Cout, M), jnp.float32),
        grid_spec=pltpu.PrefetchScalarGridSpec(
            num_scalar_prefetch=0,
            grid=(B,),
            in_specs=[
                pl.BlockSpec((1, P, M), lambda b: (b, 0, 0)),
                pl.BlockSpec((Cout, P), lambda b: (0, 0)),
                pl.BlockSpec((Cout, M), lambda b: (0, 0)),
            ],
            out_specs=pl.BlockSpec((1, Cout, M), lambda b: (b, 0, 0)),
        ),
        compiler_params=pltpu.CompilerParams(
            dimension_semantics=("parallel",)),
        cost_estimate=cost,
    )(patches, w2d, cb)

    # Lane-dense slab -> NCDHW is a pure reshape (no transpose needed).
    return out.reshape(B, Cout, Do, Do, Do)


def reference_coordconv3d(x_ncdhw, w_oidhw, bias, *, kernel_size):
    """Pure-JAX reference reproducing the PyTorch forward (for verification)."""
    B, Cin, D, _, _ = x_ncdhw.shape
    zi = jnp.arange(D, dtype=jnp.float32)[:, None, None]
    yi = jnp.arange(D, dtype=jnp.float32)[None, :, None]
    xx = jnp.broadcast_to(zi, (D, D, D)) / (D - 1) * 2.0 - 1.0
    yy_norm = jnp.broadcast_to(yi, (D, D, D)) / (D - 1)
    yy = yy_norm * 2.0 - 1.0
    zz = yy_norm / (D - 1) * 2.0 - 1.0
    coords = jnp.broadcast_to(jnp.stack([xx, yy, zz], axis=0)[None],
                              (B, 3, D, D, D))
    inp = jnp.concatenate([x_ncdhw, coords], axis=1)
    out = jax.lax.conv_general_dilated(
        inp, w_oidhw, window_strides=(1, 1, 1), padding="VALID",
        dimension_numbers=("NCDHW", "OIDHW", "NCDHW"),
        precision=jax.lax.Precision.HIGHEST)
    return out + bias[None, :, None, None, None]


if __name__ == "__main__":
    # Small deterministic problem: batch=2, in_channels=4, cubic spatial D=10,
    # out_channels=8, kernel_size=3 -> output spatial 8 (M = 512 lanes).
    B, Cin, D, Cout, K = 2, 4, 10, 8, 3

    key = jax.random.PRNGKey(0)
    kx, kw, kb = jax.random.split(key, 3)

    x = jax.random.normal(kx, (B, Cin, D, D, D), dtype=jnp.float32)

    # Deterministic Conv3d parameter init (PyTorch-style uniform bound 1/sqrt(fan_in)).
    fan_in = (Cin + 3) * K * K * K
    bound = 1.0 / jnp.sqrt(jnp.float32(fan_in))
    w = jax.random.uniform(kw, (Cout, Cin + 3, K, K, K),
                           minval=-bound, maxval=bound, dtype=jnp.float32)
    b = jax.random.uniform(kb, (Cout,), minval=-bound, maxval=bound,
                           dtype=jnp.float32)

    out = coordconv3d(x, w, b, kernel_size=K)
    out = jax.block_until_ready(out)

    ref = jax.block_until_ready(reference_coordconv3d(x, w, b, kernel_size=K))
    assert out.shape == (B, Cout, D - K + 1, D - K + 1, D - K + 1), out.shape
    assert jnp.allclose(out, ref, atol=2e-2, rtol=2e-2), float(
        jnp.max(jnp.abs(out - ref)))

    print("KERNEL_OK")
</pallas_src>

<mosaic_0001>
module attributes {stable_mosaic.version = 11 : i64} {
  func.func @coordconv3d_kernel(%arg0: i32, %arg1: memref<1x108x512xbf16, #tpu.memory_space<vmem>>, %arg2: memref<8x108xbf16, #tpu.memory_space<vmem>>, %arg3: memref<8x512xf32, #tpu.memory_space<vmem>>, %arg4: memref<1x8x512xf32, #tpu.memory_space<vmem>>) attributes {dimension_semantics = [#tpu.dimension_semantics<parallel>], iteration_bounds = array<i64: 2>, scalar_prefetch = 0 : i64, scratch_operands = 0 : i64, tpu.core_type = #tpu.core_type<tc>, window_params = [{transform_indices = @transform_0, window_bounds = array<i64: 1, 108, 512>}, {pipeline_mode = #tpu.pipeline_mode<synchronous>, transform_indices = @transform_1, window_bounds = array<i64: 8, 108>}, {pipeline_mode = #tpu.pipeline_mode<synchronous>, transform_indices = @transform_2, window_bounds = array<i64: 8, 512>}, {transform_indices = @transform_3, window_bounds = array<i64: 1, 8, 512>}]} {
    %c0 = arith.constant 0 : index
    %c0_0 = arith.constant 0 : index
    %0 = vector.load %arg2[%c0, %c0_0] : memref<8x108xbf16, #tpu.memory_space<vmem>>, vector<8x108xbf16>
    %c0_1 = arith.constant 0 : index
    %c0_2 = arith.constant 0 : index
    %c0_3 = arith.constant 0 : index
    %1 = vector.load %arg1[%c0_1, %c0_2, %c0_3] : memref<1x108x512xbf16, #tpu.memory_space<vmem>>, vector<1x108x512xbf16>
    %2 = vector.shape_cast %1 : vector<1x108x512xbf16> to vector<108x512xbf16>
    %cst = arith.constant dense<0.000000e+00> : vector<8x512xf32>
    %3 = tpu.matmul %0, %2, %cst {dimension_numbers = #tpu.dot_dimension_numbers<[1], [0], [0], [1], [0, 0, 1, 1], [], []>} : vector<8x108xbf16>, vector<108x512xbf16>, vector<8x512xf32> -> vector<8x512xf32>
    %c0_4 = arith.constant 0 : index
    %c0_5 = arith.constant 0 : index
    %4 = vector.load %arg3[%c0_4, %c0_5] : memref<8x512xf32, #tpu.memory_space<vmem>>, vector<8x512xf32>
    %5 = arith.addf %3, %4 : vector<8x512xf32>
    %c0_6 = arith.constant 0 : index
    %c0_7 = arith.constant 0 : index
    %c0_8 = arith.constant 0 : index
    %6 = vector.load %arg4[%c0_6, %c0_7, %c0_8] : memref<1x8x512xf32, #tpu.memory_space<vmem>>, vector<1x8x512xf32>
    %7 = vector.shape_cast %6 : vector<1x8x512xf32> to vector<8x512xf32>
    %8 = vector.shape_cast %5 : vector<8x512xf32> to vector<1x8x512xf32>
    tpu.vector_store %arg4[%c0_6, %c0_7, %c0_8], %8 {strides = array<i32>} : memref<1x8x512xf32, #tpu.memory_space<vmem>>, vector<1x8x512xf32>,
    return
  }
  func.func @transform_0(%arg0: i32) -> (i32, i32, i32) {
    %c0_i32 = arith.constant 0 : i32
    %c0_i32_0 = arith.constant 0 : i32
    %c0_i32_1 = arith.constant 0 : i32
    return %arg0, %c0_i32, %c0_i32_0 : i32, i32, i32
  }
  func.func @transform_1(%arg0: i32) -> (i32, i32) {
    %c0_i32 = arith.constant 0 : i32
    %c0_i32_0 = arith.constant 0 : i32
    %c0_i32_1 = arith.constant 0 : i32
    return %c0_i32, %c0_i32_0 : i32, i32
  }
  func.func @transform_2(%arg0: i32) -> (i32, i32) {
    %c0_i32 = arith.constant 0 : i32
    %c0_i32_0 = arith.constant 0 : i32
    %c0_i32_1 = arith.constant 0 : i32
    return %c0_i32, %c0_i32_0 : i32, i32
  }
  func.func @transform_3(%arg0: i32) -> (i32, i32, i32) {
    %c0_i32 = arith.constant 0 : i32
    %c0_i32_0 = arith.constant 0 : i32
    %c0_i32_1 = arith.constant 0 : i32
    return %arg0, %c0_i32, %c0_i32_0 : i32, i32, i32
  }
}

</mosaic_0001>

<llo_original>
// kernel: tpu_custom_call.1
$region0: #{tpu_custom_call.1}
  #allocation0 [shape = 'u32[]', space=smem, size = 0x4, offset = 0x4, fixed_abs, tag = 'smem constant byte address 0x4 - core index']
  #allocation1 [shape = 'u32[144,128]{1,0:T(1,128)}', space=vmem, size = 0x12000, scoped, tag = 'internal scratch']
  %s0 = inlined_call_operand.vmem [shape: bf16[2,108,512], index: 0, kind: input, shape index: {}]
  %s1 = inlined_call_operand.vmem [shape: bf16[8,108], index: 1, kind: input, shape index: {}]
  %s2 = inlined_call_operand.vmem [shape: f32[8,512], index: 2, kind: input, shape index: {}]
  %s3 = inlined_call_operand.hbm [shape: f32[2,8,512], index: 3, kind: output, shape index: {}]
  %s4 = sld [smem:[#allocation0]]
  $region45: #{tpu_custom_call.1} parent=0
    _
  %s6 = ssub.s32 1, %s4
  %s7 = scalar_select 0, %s6, %s4
  $region1: #{tpu_custom_call.1} parent=0
    #allocation2 [shape = 'u8[32768]{0}', space=vmem, size = 0x8000, scoped, tag = 'output window, operand 0']
    #allocation3 [shape = 's32[2]{0}', space=sflag, size = 0x8, scoped, tag = 'scoped memory for tpu_custom_call.1']
    %8 = vsyncpa [#allocation3], 0
    %s9 = scalar_lea.sflag [#allocation3], 1
    %10 = vsyncpa %s9, 0
    loop: start=0, step=1, limit=4
    $region2: #{tpu_custom_call.1} parent=1 // loop_pre_header
      _
    $region3: #{tpu_custom_call.1} parent=1 // loop_header
      %s12 = sphi 0, %s16
      %p13 = scmp.ge.s32.totalorder %s12, 4
      %s22 = sphi 0, %s24
      %s25 = sphi 0, %s22
      %s26 = sphi 0, %s25
      %s42 = sphi 0, %s26
      %s46 = sphi 0, %s46
      %s48 = sphi 0, %s46
      %s49 = sphi 0, %s48
      %s63 = sphi 0, %s49
      %s67 = sphi 0, %s67
      %s69 = sphi 0, %s67
      %s70 = sphi 0, %s69
      %s84 = sphi 0, %s70
      %s90 = sphi 0, %s92
      %s93 = sphi 0, %s90
      %s94 = sphi 0, %s93
      %s110 = sphi 0, %s94
    $region4: #{tpu_custom_call.1} parent=1 // loop_header_branch
      %15 = sbr.rel (%p13) target = $region8
    $region5: #{tpu_custom_call.1} parent=1 // loop_body
      %s17 = ssub.s32 %s12, 1
      %s18 = ssub.s32 %s12, 2
      %s19 = sadd.s32 %s12, 1
      %s20 = ssub.s32 %s12, %s19
      %p21 = scmp.eq.s32.totalorder %s20, 0
      %s23 = sadd.s32 %s22, 1
      %s24 = scalar_select %p21, %s22, %s23
      %p27 = pneg %p21
      %p28 = scmp.eq.s32.totalorder %s12, 1
      %p29 = por %p27, %p28
      %p30 = scmp.ne.s32.totalorder %s22, %s25
      %p31 = scmp.eq.s32.totalorder %s12, 0
      %p32 = por %p30, %p31
      %p33 = scmp.ne.s32.totalorder %s22, %s25
      %p34 = scmp.eq.s32.totalorder %s17, 1
      %p35 = por %p33, %p34
      %p36 = scmp.ne.s32.totalorder %s25, %s26
      %p37 = scmp.eq.s32.totalorder %s17, 0
      %p38 = por %p36, %p37
      %p39 = scmp.ne.s32.totalorder %s25, %s26
      %p40 = scmp.eq.s32.totalorder %s18, 1
      %p41 = por %p39, %p40
      %p43 = scmp.ne.s32.totalorder %s26, %s42
      %p44 = scmp.eq.s32.totalorder %s18, 0
      %p45 = por %p43, %p44
      %s47 = sadd.s32 %s46, 1
      %p50 = scmp.eq.s32.totalorder %s12, 1
      %p51 = scmp.ne.s32.totalorder %s46, %s48
      %p52 = scmp.eq.s32.totalorder %s12, 0
      %p53 = por %p51, %p52
      %p54 = scmp.ne.s32.totalorder %s46, %s48
      %p55 = scmp.eq.s32.totalorder %s17, 1
      %p56 = por %p54, %p55
      %p57 = scmp.ne.s32.totalorder %s48, %s49
      %p58 = scmp.eq.s32.totalorder %s17, 0
      %p59 = por %p57, %p58
      %p60 = scmp.ne.s32.totalorder %s48, %s49
      %p61 = scmp.eq.s32.totalorder %s18, 1
      %p62 = por %p60, %p61
      %p64 = scmp.ne.s32.totalorder %s49, %s63
      %p65 = scmp.eq.s32.totalorder %s18, 0
      %p66 = por %p64, %p65
      %s68 = sadd.s32 %s67, 1
      %p71 = scmp.eq.s32.totalorder %s12, 1
      %p72 = scmp.ne.s32.totalorder %s67, %s69
      %p73 = scmp.eq.s32.totalorder %s12, 0
      %p74 = por %p72, %p73
      %p75 = scmp.ne.s32.totalorder %s67, %s69
      %p76 = scmp.eq.s32.totalorder %s17, 1
      %p77 = por %p75, %p76
      %p78 = scmp.ne.s32.totalorder %s69, %s70
      %p79 = scmp.eq.s32.totalorder %s17, 0
      %p80 = por %p78, %p79
      %p81 = scmp.ne.s32.totalorder %s69, %s70
      %p82 = scmp.eq.s32.totalorder %s18, 1
      %p83 = por %p81, %p82
      %p85 = scmp.ne.s32.totalorder %s70, %s84
      %p86 = scmp.eq.s32.totalorder %s18, 0
      %p87 = por %p85, %p86
      %s88 = ssub.s32 %s12, %s19
      %p89 = scmp.eq.s32.totalorder %s88, 0
      %s91 = sadd.s32 %s90, 1
      %s92 = scalar_select %p89, %s90, %s91
      %p95 = pneg %p89
      %p96 = scmp.eq.s32.totalorder %s12, 1
      %p97 = por %p95, %p96
      %p98 = scmp.ne.s32.totalorder %s90, %s93
      %p99 = scmp.eq.s32.totalorder %s12, 0
      %p100 = por %p98, %p99
      %p101 = scmp.ne.s32.totalorder %s90, %s93
      %p102 = scmp.eq.s32.totalorder %s17, 1
      %p103 = por %p101, %p102
      %p104 = scmp.ne.s32.totalorder %s93, %s94
      %p105 = scmp.eq.s32.totalorder %s17, 0
      %p106 = por %p104, %p105
      %p107 = scmp.ne.s32.totalorder %s93, %s94
      %p108 = scmp.eq.s32.totalorder %s18, 1
      %p109 = por %p107, %p108
      %p111 = scmp.ne.s32.totalorder %s94, %s110
      %p112 = scmp.eq.s32.totalorder %s18, 0
      %p113 = por %p111, %p112
      %p114 = scmp.le.s32.totalorder 1, %s12
      %p115 = scmp.lt.s32.totalorder %s12, 3
      %p116 = pnand %p114, %p115
      %p117 = pneg %p116
      // Predicated region
      $region9: #{tpu_custom_call.1} parent=5 // pred_check
        _
      $region10: #{tpu_custom_call.1} parent=5 // pred_check_branch
        %119 = sbr.rel (%p116) target = $region12
      $region11: #{tpu_custom_call.1} parent=5 // pred_region
        %s120 = ssub.s32 %s12, 1
        // Predicated region
        $region13: #{tpu_custom_call.1} parent=11 // pred_check
          %p121 = pneg %p59
        $region14: #{tpu_custom_call.1} parent=11 // pred_check_branch
          %123 = sbr.rel (%p121) target = $region16
        $region15: #{tpu_custom_call.1} parent=11 // pred_region
          _
        $region16: #{tpu_custom_call.1} parent=11 // pred_fallthru
          _
        // Predicated region
        $region17: #{tpu_custom_call.1} parent=11 // pred_check
          %p124 = pneg %p80
        $region18: #{tpu_custom_call.1} parent=11 // pred_check_branch
          %126 = sbr.rel (%p124) target = $region20
        $region19: #{tpu_custom_call.1} parent=11 // pred_region
          _
        $region20: #{tpu_custom_call.1} parent=11 // pred_fallthru
          _
      $region12: #{tpu_custom_call.1} parent=5 // pred_fallthru
        _
      %p127 = scmp.lt.s32.totalorder %s12, 2
      // Predicated region
      $region21: #{tpu_custom_call.1} parent=5 // pred_check
        %p128 = pneg %p127
      $region22: #{tpu_custom_call.1} parent=5 // pred_check_branch
        %130 = sbr.rel (%p128) target = $region24
      $region23: #{tpu_custom_call.1} parent=5 // pred_region
        // Predicated region
        $region25: #{tpu_custom_call.1} parent=23 // pred_check
          %p131 = pneg %p32
        $region26: #{tpu_custom_call.1} parent=23 // pred_check_branch
          %133 = sbr.rel (%p131) target = $region28
        $region27: #{tpu_custom_call.1} parent=23 // pred_region
          %p134 = scmp.lt.s32.totalorder %s12, 1
          %s135 = scalar_select %p134, %s12, 1
          %s136 = smul.addr %s135, 56
          %s137 = smul.addr %s136, 4
          %s138 = scalar_lea.vmem %s0, %s137
        $region28: #{tpu_custom_call.1} parent=23 // pred_fallthru
          _
      $region24: #{tpu_custom_call.1} parent=5 // pred_fallthru
        _
      %p139 = scmp.le.s32.totalorder 1, %s12
      %p140 = scmp.lt.s32.totalorder %s12, 3
      %p141 = pnand %p139, %p140
      %p142 = pneg %p141
      // Predicated region
      $region29: #{tpu_custom_call.1} parent=5 // pred_check
        _
      $region30: #{tpu_custom_call.1} parent=5 // pred_check_branch
        %144 = sbr.rel (%p141) target = $region32
      $region31: #{tpu_custom_call.1} parent=5 // pred_region
        %s145 = ssub.s32 %s12, 1
        %p146 = scmp.lt.s32.totalorder %s17, 1
        %s147 = scalar_select %p146, %s17, 1
        %s148 = smul.addr %s147, 56
        %s149 = smul.addr %s148, 4
        %s150 = scalar_lea.vmem %s0, %s149
        %p151 = pneg %p38
        %p152 = pneg %p35
        %p153 = pneg %p59
        %p154 = pneg %p56
        %p155 = pneg %p80
        %p156 = pneg %p77
        %p157 = pneg %p106
        %p158 = pneg %p103
        %s159 = sand.u32 %s93, 1
        %s160 = scalar_lea.sflag [#allocation3], %s159
        %s161 = sand.u32 %s93, 1
        %s162 = smul.addr %s161, 32
        %s163 = scalar_lea.vmem [#allocation2], %s162
        %p164 = scmp.lt.s32.totalorder %s17, 1
        %s165 = scalar_select %p164, %s17, 1
        %s166 = smul.addr %s165, 56
        %s167 = smul.addr %s166, 4
        %s168 = scalar_lea.vmem %s0, %s167
        %v170 = vld [vmem:[%s1] sm:$0xf]
        %v171 = vld [vmem:[%s168] sm:$0xff]
        %v172 = vld [vmem:[%s168 + $0x8] sm:$0xff]
        %v173 = vld [vmem:[%s168 + $0x10] sm:$0xff]
        %v174 = vld [vmem:[%s168 + $0x18] sm:$0xff]
        %v175 = vld [vmem:[%s168 + $0x20] sm:$0xff]
        %v176 = vld [vmem:[%s168 + $0x28] sm:$0xff]
        %v177 = vld [vmem:[%s168 + $0x30] sm:$0xff]
        %v178 = vld [vmem:[%s168 + $0x38] sm:$0xff]
        %v179 = vld [vmem:[%s168 + $0x40] sm:$0xff]
        %v180 = vld [vmem:[%s168 + $0x48] sm:$0xff]
        %v181 = vld [vmem:[%s168 + $0x50] sm:$0xff]
        %v182 = vld [vmem:[%s168 + $0x58] sm:$0xff]
        %v183 = vld [vmem:[%s168 + $0x60] sm:$0xff]
        %v184 = vld [vmem:[%s168 + $0x68] sm:$0xff]
        %v185 = vld [vmem:[%s168 + $0x70] sm:$0xff]
        %v186 = vld [vmem:[%s168 + $0x78] sm:$0xff]
        %v187 = vld [vmem:[%s168 + $0x80] sm:$0xff]
        %v188 = vld [vmem:[%s168 + $0x88] sm:$0xff]
        %v189 = vld [vmem:[%s168 + $0x90] sm:$0xff]
        %v190 = vld [vmem:[%s168 + $0x98] sm:$0xff]
        %v191 = vld [vmem:[%s168 + $0xa0] sm:$0xff]
        %v192 = vld [vmem:[%s168 + $0xa8] sm:$0xff]
        %v193 = vld [vmem:[%s168 + $0xb0] sm:$0xff]
        %v194 = vld [vmem:[%s168 + $0xb8] sm:$0xff]
        %v195 = vld [vmem:[%s168 + $0xc0] sm:$0xff]
        %v196 = vld [vmem:[%s168 + $0xc8] sm:$0xff]
        %v197 = vld [vmem:[%s168 + $0xd0] sm:$0x33]
        %v198 = vld [vmem:[%s168 + $0xd8] sm:$0x33]
        %v199 = vld [vmem:[%s2] sm:$0xff]
        %v200 = vld [vmem:[%s2 + $0x8] sm:$0xff]
        %v201 = vld [vmem:[%s2 + $0x10] sm:$0xff]
        %v202 = vld [vmem:[%s2 + $0x18] sm:$0xff]
        %v231 = vunpack.c.l.b16 %v171
        %v232 = vunpack.c.h.b16 %v171
        %v233 = vunpack.c.l.b16 %v172
        %v234 = vunpack.c.h.b16 %v172
        %v235 = vunpack.c.l.b16 %v173
        %v236 = vunpack.c.h.b16 %v173
        %v237 = vunpack.c.l.b16 %v174
        %v238 = vunpack.c.h.b16 %v174
        %v239 = vunpack.c.l.b16 %v175
        %v240 = vunpack.c.h.b16 %v175
        %v241 = vunpack.c.l.b16 %v176
        %v242 = vunpack.c.h.b16 %v176
        %v243 = vunpack.c.l.b16 %v177
        %v244 = vunpack.c.h.b16 %v177
        %v245 = vunpack.c.l.b16 %v178
        %v246 = vunpack.c.h.b16 %v178
        %v247 = vunpack.c.l.b16 %v179
        %v248 = vunpack.c.h.b16 %v179
        %v249 = vunpack.c.l.b16 %v180
        %v250 = vunpack.c.h.b16 %v180
        %v251 = vunpack.c.l.b16 %v181
        %v252 = vunpack.c.h.b16 %v181
        %v253 = vunpack.c.l.b16 %v182
        %v254 = vunpack.c.h.b16 %v182
        %v255 = vunpack.c.l.b16 %v183
        %v256 = vunpack.c.h.b16 %v183
        %v257 = vunpack.c.l.b16 %v184
        %v258 = vunpack.c.h.b16 %v184
        %v259 = vunpack.c.l.b16 %v185
        %v260 = vunpack.c.h.b16 %v185
        %v261 = vunpack.c.l.b16 %v186
        %v262 = vunpack.c.h.b16 %v186
        %v263 = vunpack.c.l.b16 %v187
        %v264 = vunpack.c.h.b16 %v187
        %v265 = vunpack.c.l.b16 %v188
        %v266 = vunpack.c.h.b16 %v188
        %v267 = vunpack.c.l.b16 %v189
        %v268 = vunpack.c.h.b16 %v189
        %v269 = vunpack.c.l.b16 %v190
        %v270 = vunpack.c.h.b16 %v190
        %v271 = vunpack.c.l.b16 %v191
        %v272 = vunpack.c.h.b16 %v191
        %v273 = vunpack.c.l.b16 %v192
        %v274 = vunpack.c.h.b16 %v192
        %v275 = vunpack.c.l.b16 %v193
        %v276 = vunpack.c.h.b16 %v193
        %v277 = vunpack.c.l.b16 %v194
        %v278 = vunpack.c.h.b16 %v194
        %v279 = vunpack.c.l.b16 %v195
        %v280 = vunpack.c.h.b16 %v195
        %v281 = vunpack.c.l.b16 %v196
        %v282 = vunpack.c.h.b16 %v196
        %v283 = vunpack.c.l.b16 %v197
        %v284 = vunpack.c.h.b16 %v197
        %v285 = vunpack.c.l.b16 %v198
        %v286 = vunpack.c.h.b16 %v198
        %v287 = vpack.c.b16 %v235, %v231
        %v288 = vpack.c.b16 %v236, %v232
        %v289 = vpack.c.b16 %v237, %v233
        %v290 = vpack.c.b16 %v238, %v234
        %v291 = vpack.c.b16 %v243, %v239
        %v292 = vpack.c.b16 %v244, %v240
        %v293 = vpack.c.b16 %v245, %v241
        %v294 = vpack.c.b16 %v246, %v242
        %v295 = vpack.c.b16 %v251, %v247
        %v296 = vpack.c.b16 %v252, %v248
        %v297 = vpack.c.b16 %v253, %v249
        %v298 = vpack.c.b16 %v254, %v250
        %v299 = vpack.c.b16 %v259, %v255
        %v300 = vpack.c.b16 %v260, %v256
        %v301 = vpack.c.b16 %v261, %v257
        %v302 = vpack.c.b16 %v262, %v258
        %v303 = vpack.c.b16 %v267, %v263
        %v304 = vpack.c.b16 %v268, %v264
        %v305 = vpack.c.b16 %v269, %v265
        %v306 = vpack.c.b16 %v270, %v266
        %v307 = vpack.c.b16 %v275, %v271
        %v308 = vpack.c.b16 %v276, %v272
        %v309 = vpack.c.b16 %v277, %v273
        %v310 = vpack.c.b16 %v278, %v274
        %v311 = vpack.c.b16 %v283, %v279
        %v312 = vpack.c.b16 %v284, %v280
        %v313 = vpack.c.b16 %v285, %v281
        %v314 = vpack.c.b16 %v286, %v282
        %vm339 = vcmask 883712
        %v341 = vsel %vm339, %v170, 0
        %vm343 = vcmask 1045504
        %v345 = vsel %vm343, %v311, 0
        %v348 = vsel %vm343, %v312, 0
        %v351 = vsel %vm343, %v313, 0
        %v354 = vsel %vm343, %v314, 0
        %356 = vmatprep.subr.bf16.mxu0 %v288
        %357 = vmatpush1.bf16.msra.mxu0 %v287
        %358 = vmatprep.subr.bf16.mxu0 %v292
        %359 = vmatpush1.bf16.msra.mxu0 %v291
        %360 = vmatprep.subr.bf16.mxu0 %v296
        %361 = vmatpush1.bf16.msra.mxu0 %v295
        %362 = vmatprep.subr.bf16.mxu0 %v300
        %363 = vmatpush1.bf16.msra.mxu0 %v299
        %364 = vmatprep.subr.bf16.mxu0 %v304
        %365 = vmatpush1.bf16.msra.mxu0 %v303
        %366 = vmatprep.subr.bf16.mxu0 %v308
        %367 = vmatpush1.bf16.msra.mxu0 %v307
        %368 = vmatprep.subr.bf16.mxu0 %v348
        %369 = vmatpush1.bf16.msra.mxu0 %v345
        %370 = vmatprep.subr.bf16.mxu0 0
        %371 = vmatpush1.bf16.msra.mxu0 0
        %372 = vmatprep.subr.bf16.mxu0 0
        %373 = vmatpush1.bf16.msra.mxu0 0
        %374 = vmatprep.subr.bf16.mxu0 0
        %375 = vmatpush1.bf16.msra.mxu0 0
        %376 = vmatprep.subr.bf16.mxu0 0
        %377 = vmatpush1.bf16.msra.mxu0 0
        %378 = vmatprep.subr.bf16.mxu0 0
        %379 = vmatpush1.bf16.msra.mxu0 0
        %380 = vmatprep.subr.bf16.mxu0 0
        %381 = vmatpush1.bf16.msra.mxu0 0
        %382 = vmatprep.subr.bf16.mxu0 0
        %383 = vmatpush1.bf16.msra.mxu0 0
        %384 = vmatprep.subr.bf16.mxu0 0
        %385 = vmatpush1.bf16.msra.mxu0 0
        %386 = vmatprep.subr.bf16.mxu0 0
        %387 = vmatpush1.bf16.msra.mxu0 0
        %388 = vmatprep.mubr.bf16.mxu0 0
        %389 = vmatmul.mubr.bf16.gmra.mrb[0].mxu0 %v341
        %v390 = vpop.f32.mrb[0].mxu0
        %v391 = vadd.f32 %v199, %v390
        %v392 = vpop.f32.mrb[0].mxu0
        %v393 = vadd.f32 %v200, %v392
        %v394 = vpop.f32.mrb[0].mxu0
        %v395 = vpop.f32.mrb[0].mxu0
        %396 = vdwg.mxu0
        %397 = vmatprep.subr.bf16.mxu0 %v290
        %398 = vmatpush1.bf16.msra.mxu0 %v289
        %399 = vmatprep.subr.bf16.mxu0 %v294
        %400 = vmatpush1.bf16.msra.mxu0 %v293
        %401 = vmatprep.subr.bf16.mxu0 %v298
        %402 = vmatpush1.bf16.msra.mxu0 %v297
        %403 = vmatprep.subr.bf16.mxu0 %v302
        %404 = vmatpush1.bf16.msra.mxu0 %v301
        %405 = vmatprep.subr.bf16.mxu0 %v306
        %406 = vmatpush1.bf16.msra.mxu0 %v305
        %407 = vmatprep.subr.bf16.mxu0 %v310
        %408 = vmatpush1.bf16.msra.mxu0 %v309
        %409 = vmatprep.subr.bf16.mxu0 %v354
        %410 = vmatpush1.bf16.msra.mxu0 %v351
        %411 = vmatprep.subr.bf16.mxu0 0
        %412 = vmatpush1.bf16.msra.mxu0 0
        %413 = vmatprep.subr.bf16.mxu0 0
        %414 = vmatpush1.bf16.msra.mxu0 0
        %415 = vmatprep.subr.bf16.mxu0 0
        %416 = vmatpush1.bf16.msra.mxu0 0
        %417 = vmatprep.subr.bf16.mxu0 0
        %418 = vmatpush1.bf16.msra.mxu0 0
        %419 = vmatprep.subr.bf16.mxu0 0
        %420 = vmatpush1.bf16.msra.mxu0 0
        %421 = vmatprep.subr.bf16.mxu0 0
        %422 = vmatpush1.bf16.msra.mxu0 0
        %423 = vmatprep.subr.bf16.mxu0 0
        %424 = vmatpush1.bf16.msra.mxu0 0
        %425 = vmatprep.subr.bf16.mxu0 0
        %426 = vmatpush1.bf16.msra.mxu0 0
        %427 = vmatprep.subr.bf16.mxu0 0
        %428 = vmatpush1.bf16.msra.mxu0 0
        %429 = vmatprep.mubr.bf16.mxu0 0
        %430 = vmatmul.mubr.bf16.gmra.mrb[0].mxu0 %v341
        %v431 = vpop.f32.mrb[0].mxu0
        %v432 = vadd.f32 %v201, %v431
        %v433 = vpop.f32.mrb[0].mxu0
        %v434 = vadd.f32 %v202, %v433
        %v435 = vpop.f32.mrb[0].mxu0
        %v436 = vpop.f32.mrb[0].mxu0
        %437 = vdwg.mxu0
        %438 = vst [vmem:[%s163] sm:$0xff] %v391
        %439 = vst [vmem:[%s163 + $0x8] sm:$0xff] %v393
        %440 = vst [vmem:[%s163 + $0x10] sm:$0xff] %v432
        %441 = vst [vmem:[%s163 + $0x18] sm:$0xff] %v434
        %s442 = sand.u32 %s93, 1
        %s443 = scalar_lea.sflag [#allocation3], %s442
        %s444 = sand.u32 %s93, 1
        %s445 = smul.addr %s444, 32
        %s446 = scalar_lea.vmem [#allocation2], %s445
        // Predicated region
        $region33: #{tpu_custom_call.1} parent=31 // pred_check
          %p447 = pneg %p103
        $region34: #{tpu_custom_call.1} parent=31 // pred_check_branch
          %449 = sbr.rel (%p447) target = $region36
        $region35: #{tpu_custom_call.1} parent=31 // pred_region
          %s451 = ssub.s32 512, 512
          %452 = vsyncadd %s443, %s451
          %s453 = smul.addr %s17, 4
          %s454 = smul.addr %s453, 128
          %s455 = scalar_lea.hbm %s3, %s454
          %s457 = sshll.u32 %s446, 4
          %s458 = int_to_ptr.vmem [resolvable:$true] %s457
          %460 = dma.vmem_to_hbm [thread:$0]  %s458, 512, %s455, %s443
        $region36: #{tpu_custom_call.1} parent=31 // pred_fallthru
          _
      $region32: #{tpu_custom_call.1} parent=5 // pred_fallthru
        _
      %p461 = scmp.le.s32.totalorder 2, %s12
      // Predicated region
      $region37: #{tpu_custom_call.1} parent=5 // pred_check
        %p462 = pneg %p461
      $region38: #{tpu_custom_call.1} parent=5 // pred_check_branch
        %464 = sbr.rel (%p462) target = $region40
      $region39: #{tpu_custom_call.1} parent=5 // pred_region
        %s465 = ssub.s32 %s12, 2
        // Predicated region
        $region41: #{tpu_custom_call.1} parent=39 // pred_check
          %p466 = pneg %p109
        $region42: #{tpu_custom_call.1} parent=39 // pred_check_branch
          %468 = sbr.rel (%p466) target = $region44
        $region43: #{tpu_custom_call.1} parent=39 // pred_region
          %s469 = sand.u32 %s94, 1
          %s470 = scalar_lea.sflag [#allocation3], %s469
          %s471 = sand.u32 %s94, 1
          %s472 = smul.addr %s471, 32
          %s473 = scalar_lea.vmem [#allocation2], %s472
          %474 = dma.done %s470, 512
        $region44: #{tpu_custom_call.1} parent=39 // pred_fallthru
          _
      $region40: #{tpu_custom_call.1} parent=5 // pred_fallthru
        _
    $region6: #{tpu_custom_call.1} parent=1 // loop_footer
      %s16 = sadd.s32 1, %s12
    $region7: #{tpu_custom_call.1} parent=1 // loop_footer_branch
      %11 = sbr.rel target = $region3
    $region8: #{tpu_custom_call.1} parent=1 // loop_exit
      _
    %475 = vsyncpa [#allocation3], 1
    %s476 = scalar_lea.sflag [#allocation3], 1
    %477 = vsyncpa %s476, 1

</llo_original>
